<compile_context>
chip_gen: v6e
topology: v6e:2x2x1
jax: 0.10.0
libtpu: 0.0.40
codegen_flags: <defaults>
</compile_context>

<pallas_src>
import functools

import jax
import jax.numpy as jnp
from jax import lax
from jax.experimental import pallas as pl
from jax.experimental.pallas import tpu as pltpu

BN_EPS = 1e-5
PADL = 8          # sublane-aligned interior start inside the halo scratch


@functools.lru_cache(maxsize=None)
def _vmem_limit_bytes():
    # Generation-aware scoped-VMEM limit: ~3/4 of physical, capped at 96 MiB
    # (v5e/v6e: 128 MiB physical -> 96 MiB; v7x: 64 MiB -> 48 MiB).
    try:
        cap = int(pltpu.get_tpu_info().vmem_capacity_bytes)
        return min(96 * 1024 * 1024, (cap * 3) // 4)
    except Exception:
        return 64 * 1024 * 1024


def _compiler_params(n_grid_axes=1):
    return pltpu.CompilerParams(
        dimension_semantics=("parallel",) * n_grid_axes,
        vmem_limit_bytes=_vmem_limit_bytes())


# ----------------------------------------------------------------------------
# Pallas kernels
# ----------------------------------------------------------------------------
def _conv3x3_from_pad(pad_ref, w_ref, H, W, Cin, Cout, compute_dtype):
    # pad_ref holds the zero-halo plane: xpad row r -> scratch row r,
    # xpad col c -> scratch col c + PADL - 1 (interior at cols [PADL, PADL+W)).
    # w_ref is im2col-ordered: rows are (ky, kx, cin), cols are cout.
    if Cin < 128:
        # Small Cin: fuse the nine taps into one K = 9*Cin contraction so the
        # MXU sees a reasonable K.
        cols = []
        for dy in range(3):
            for dx in range(3):
                c0 = dx + PADL - 1
                cols.append(pad_ref[dy:dy + H, c0:c0 + W, :].reshape(H * W, Cin))
        patches = jnp.concatenate(cols, axis=-1).astype(compute_dtype)
        return jnp.dot(patches, w_ref[...], preferred_element_type=jnp.float32)
    # Large Cin: accumulate nine K = Cin dots (no 9x im2col VMEM temporary).
    acc = jnp.zeros((H * W, Cout), jnp.float32)
    k = 0
    for dy in range(3):
        for dx in range(3):
            c0 = dx + PADL - 1
            tap = pad_ref[dy:dy + H, c0:c0 + W, :].reshape(H * W, Cin)
            acc = acc + jnp.dot(tap.astype(compute_dtype),
                                w_ref[k * Cin:(k + 1) * Cin, :],
                                preferred_element_type=jnp.float32)
            k += 1
    return acc


def _hg_block_kernel(x_ref, *rest, H, W, Cin, Cmid, Cout, L, add_identity,
                     compute_dtype):
    # Fused HG block for one image:
    #   L x (3x3 conv + folded BN + ReLU)  ->  concat-fused 1x1 agg GEMM
    #   + folded BN + ReLU  ->  ESE (mean -> 1x1 conv + bias -> sigmoid -> scale)
    #   -> optional residual add.
    w_refs = rest[:L]                                   # per-layer im2col weights
    lbias_ref, wagg_ref, tail_ref, wese_ref, o_ref = rest[L:L + 5]
    pad_refs = rest[L + 5:]                             # halo scratches

    # Zero the halo scratches every step (cheap VPU work; keeps the border
    # correct under megacore grid partitioning without relying on step 0).
    for pr in pad_refs:
        pr[...] = jnp.zeros(pr.shape, pr.dtype)

    x0 = x_ref[...].astype(compute_dtype)               # (H, W, Cin)
    branches = [x0.reshape(H * W, Cin)]                 # concat fused into GEMM

    cur_img = x0
    cur_c = Cin
    for l in range(L):
        pr = pad_refs[0] if l == 0 else pad_refs[1]
        # Sublane-aligned interior store (PADL multiple of 8, W multiple of 8).
        pr[1:H + 1, PADL:PADL + W, :] = cur_img
        y = _conv3x3_from_pad(pr, w_refs[l], H, W, cur_c, Cmid, compute_dtype)
        y = jnp.maximum(y + lbias_ref[l:l + 1, :], 0.0)  # folded-BN bias + ReLU
        yb = y.astype(compute_dtype)                     # (H*W, Cmid)
        branches.append(yb)
        cur_img = yb.reshape(H, W, Cmid)
        cur_c = Cmid

    cins = (Cin,) + (Cmid,) * L
    if max(cins) < 128:
        # Merge all small-K branch dots into one contraction (MXU K-util).
        xcat = jnp.concatenate(branches, axis=-1)        # (H*W, Ctot)
        acc = jnp.dot(xcat, wagg_ref[...], preferred_element_type=jnp.float32)
    else:
        acc = jnp.zeros((H * W, Cout), jnp.float32)
        off = 0
        for br, ci in zip(branches, cins):
            acc = acc + jnp.dot(br, wagg_ref[off:off + ci, :],
                                preferred_element_type=jnp.float32)
            off += ci

    y = jnp.maximum(acc + tail_ref[0:1, :], 0.0)         # agg folded BN + ReLU
    avg = jnp.mean(y, axis=0, keepdims=True)             # ESE global avg (1, Cout)
    gate = jax.nn.sigmoid(
        jnp.dot(avg, wese_ref[...], preferred_element_type=jnp.float32)
        + tail_ref[1:2, :])
    y = y * gate
    if add_identity:                                     # fused residual (Cin==Cout)
        y = y + branches[0].astype(jnp.float32)
    o_ref[...] = y.reshape(H, W, Cout).astype(o_ref.dtype)


def _dwconv_bn_kernel(x_ref, w_ref, bias_ref, o_ref, *, Ho, Wo, C):
    # Depthwise 3x3, stride 2, pad 1, groups=C; BN scale folded into w, bias
    # added here.  x_ref is the phase-split padded plane:
    #   x_ref[py*2+px, a, b, c] == xpad[2a+py, 2b+px, c]
    # so every stride-2 tap is a contiguous slice.  Pure VPU, f32 accumulate.
    acc = jnp.zeros((Ho, Wo, C), jnp.float32)
    for dy in range(3):
        ra, py = (0, dy) if dy < 2 else (1, 0)
        for dx in range(3):
            ca, px = (0, dx) if dx < 2 else (1, 0)
            tap = x_ref[py * 2 + px, ra:ra + Ho, ca:ca + Wo, :]
            acc = acc + tap.astype(jnp.float32) * w_ref[dy * 3 + dx]
    o_ref[...] = (acc + bias_ref[...]).astype(o_ref.dtype)


# ----------------------------------------------------------------------------
# pallas_call wrappers (grid over batch, marked "parallel")
# ----------------------------------------------------------------------------
def dwconv3x3_s2_bn(x, w9, bias, out_dtype):
    N, H, W, C = x.shape
    Ho, Wo = (H - 1) // 2 + 1, (W - 1) // 2 + 1
    Hp, Wp = 2 * (Ho + 1), 2 * (Wo + 1)
    # One padded + phase-split (space-to-depth) copy of the stage input in XLA;
    # the nine stride-2 taps are then contiguous slices inside the kernel.
    xp = jnp.pad(x, ((0, 0), (1, Hp - H - 1), (1, Wp - W - 1), (0, 0)))
    xph = xp.reshape(N, Ho + 1, 2, Wo + 1, 2, C).transpose(0, 2, 4, 1, 3, 5)
    xph = xph.reshape(N, 4, Ho + 1, Wo + 1, C)
    kern = functools.partial(_dwconv_bn_kernel, Ho=Ho, Wo=Wo, C=C)
    return pl.pallas_call(
        kern,
        out_shape=jax.ShapeDtypeStruct((N, Ho, Wo, C), out_dtype),
        grid=(N,),
        in_specs=[
            pl.BlockSpec((None, 4, Ho + 1, Wo + 1, C),
                         lambda n: (n, 0, 0, 0, 0)),
            pl.BlockSpec((9, 1, C), lambda n: (0, 0, 0)),
            pl.BlockSpec((1, C), lambda n: (0, 0)),
        ],
        out_specs=pl.BlockSpec((None, Ho, Wo, C), lambda n: (n, 0, 0, 0)),
        compiler_params=_compiler_params(1),
    )(xph, w9, bias)


def hg_block_pallas(x, w_layers, lbias, w_agg, tail, w_ese, add_identity,
                    compute_dtype, out_dtype):
    N, H, W, Cin = x.shape
    L = len(w_layers)
    Cmid = int(w_layers[0].shape[-1])
    Cout = int(w_agg.shape[-1])
    assert (not add_identity) or Cin == Cout
    kern = functools.partial(_hg_block_kernel, H=H, W=W, Cin=Cin, Cmid=Cmid,
                             Cout=Cout, L=L, add_identity=add_identity,
                             compute_dtype=compute_dtype)
    in_specs = [pl.BlockSpec((None, H, W, Cin), lambda n: (n, 0, 0, 0))]
    in_specs += [pl.BlockSpec(tuple(w.shape), lambda n: (0, 0)) for w in w_layers]
    in_specs += [
        pl.BlockSpec(tuple(lbias.shape), lambda n: (0, 0)),
        pl.BlockSpec(tuple(w_agg.shape), lambda n: (0, 0)),
        pl.BlockSpec(tuple(tail.shape), lambda n: (0, 0)),
        pl.BlockSpec(tuple(w_ese.shape), lambda n: (0, 0)),
    ]
    scratch = [pltpu.VMEM((H + 2, W + PADL + 1, Cin), compute_dtype)]
    if L > 1:
        scratch.append(pltpu.VMEM((H + 2, W + PADL + 1, Cmid), compute_dtype))
    return pl.pallas_call(
        kern,
        out_shape=jax.ShapeDtypeStruct((N, H, W, Cout), out_dtype),
        grid=(N,),
        in_specs=in_specs,
        out_specs=pl.BlockSpec((None, H, W, Cout), lambda n: (n, 0, 0, 0)),
        scratch_shapes=scratch,
        compiler_params=_compiler_params(1),
    )(x, *w_layers, lbias, w_agg, tail, w_ese)


# ----------------------------------------------------------------------------
# Parameter construction (deterministic, PyTorch-shaped weights)
# ----------------------------------------------------------------------------
class KeyGen:
    def __init__(self, key):
        self._key = key

    def __call__(self):
        self._key, sub = jax.random.split(self._key)
        return sub


def _fold_bn(gamma, beta, mean, var):
    scale = gamma / jnp.sqrt(var + BN_EPS)
    bias = beta - mean * scale
    return scale, bias


def make_convbnact(kg, cin, cout, ksize, groups=1):
    w = 0.1 * jax.random.normal(kg(), (cout, cin // groups, ksize, ksize),
                                jnp.float32)
    gamma = jax.random.uniform(kg(), (cout,), jnp.float32, 0.5, 1.5)
    beta = 0.1 * jax.random.normal(kg(), (cout,), jnp.float32)
    mean = 0.1 * jax.random.normal(kg(), (cout,), jnp.float32)
    var = jax.random.uniform(kg(), (cout,), jnp.float32, 0.5, 1.5)
    scale, bias = _fold_bn(gamma, beta, mean, var)
    return {'w': w, 'scale': scale, 'bias': bias}


def make_ese(kg, c):
    w = 0.1 * jax.random.normal(kg(), (c, c, 1, 1), jnp.float32)
    b = 0.1 * jax.random.normal(kg(), (c,), jnp.float32)
    return {'w': w, 'b': b}


def build_params(in_c, mid_c, out_c, block_num, layer_num, kg):
    params = {'downsample': make_convbnact(kg, in_c, in_c, 3, groups=in_c)}
    blocks = []
    cin = in_c
    for b in range(block_num):
        layers, c = [], cin
        for _ in range(layer_num):
            layers.append(make_convbnact(kg, c, mid_c, 3))
            c = mid_c
        blocks.append({'layers': layers,
                       'agg': make_convbnact(kg, cin + layer_num * mid_c, out_c, 1),
                       'ese': make_ese(kg, out_c),
                       'identity': b > 0})
        cin = out_c
    params['blocks'] = blocks
    return params


# ----------------------------------------------------------------------------
# Weight prep: BN folding into weights, im2col layout, packed biases, one-time
# cast of the MXU operands to compute_dtype (do this once, reuse per forward).
# ----------------------------------------------------------------------------
def prepare_params(params, compute_dtype):
    prep = {}
    ds = params['downsample']
    C = ds['w'].shape[0]
    w9 = jnp.transpose(ds['w'], (2, 3, 1, 0)).reshape(9, 1, C)
    prep['ds_w9'] = (w9 * ds['scale'].reshape(1, 1, C)).astype(jnp.float32)
    prep['ds_bias'] = ds['bias'].reshape(1, C).astype(jnp.float32)

    blocks = []
    for blk in params['blocks']:
        layers_w, lbias = [], []
        for lp in blk['layers']:
            cout, cin = lp['w'].shape[0], lp['w'].shape[1]
            w = jnp.transpose(lp['w'], (2, 3, 1, 0)).reshape(9 * cin, cout)
            w = w * lp['scale'].reshape(1, cout)          # fold BN scale
            layers_w.append(w.astype(compute_dtype))
            lbias.append(lp['bias'])
        lbias = jnp.stack(lbias, axis=0).astype(jnp.float32)      # (L, Cmid)

        ap, ep = blk['agg'], blk['ese']
        cout = ap['w'].shape[0]
        w_agg = jnp.transpose(ap['w'][:, :, 0, 0], (1, 0))        # (Ctot, Cout)
        w_agg = (w_agg * ap['scale'].reshape(1, cout)).astype(compute_dtype)
        w_ese = jnp.transpose(ep['w'][:, :, 0, 0], (1, 0)).astype(jnp.float32)
        tail = jnp.stack([ap['bias'], ep['b']], axis=0).astype(jnp.float32)
        blocks.append({'layers_w': layers_w, 'lbias': lbias, 'w_agg': w_agg,
                       'tail': tail, 'w_ese': w_ese, 'identity': blk['identity']})
    prep['blocks'] = blocks
    return prep


# ----------------------------------------------------------------------------
# Full HG_Stage forward (Pallas) and pure-JAX reference
# ----------------------------------------------------------------------------
def hg_stage_pallas(params, x_nchw, compute_dtype=jnp.bfloat16,
                    storage_dtype=None):
    if storage_dtype is None:
        storage_dtype = (jnp.bfloat16
                         if jnp.dtype(compute_dtype) == jnp.dtype(jnp.bfloat16)
                         else jnp.float32)
    prep = prepare_params(params, compute_dtype)
    x = jnp.transpose(x_nchw, (0, 2, 3, 1))                 # NCHW -> NHWC
    x = dwconv3x3_s2_bn(x.astype(storage_dtype), prep['ds_w9'],
                        prep['ds_bias'], out_dtype=storage_dtype)
    for blk in prep['blocks']:
        x = hg_block_pallas(x, blk['layers_w'], blk['lbias'], blk['w_agg'],
                            blk['tail'], blk['w_ese'], blk['identity'],
                            compute_dtype=compute_dtype,
                            out_dtype=storage_dtype)
    return jnp.transpose(x, (0, 3, 1, 2)).astype(jnp.float32)   # NHWC -> NCHW


def _ref_convbn(x, p, ksize, stride, groups, use_act):
    w = jnp.transpose(p['w'], (2, 3, 1, 0))                  # HWIO
    pad = (ksize - 1) // 2
    y = lax.conv_general_dilated(
        x, w, (stride, stride), padding=((pad, pad), (pad, pad)),
        dimension_numbers=('NHWC', 'HWIO', 'NHWC'),
        feature_group_count=groups)
    y = y * p['scale'] + p['bias']
    if use_act:
        y = jnp.maximum(y, 0.0)
    return y


def _ref_ese(x, p):
    avg = jnp.mean(x, axis=(1, 2), keepdims=True)
    s = jnp.einsum('nhwc,oc->nhwo', avg, p['w'][:, :, 0, 0]) + p['b']
    return x * jax.nn.sigmoid(s)


def hg_stage_ref(params, x_nchw):
    x = jnp.transpose(x_nchw, (0, 2, 3, 1))
    ds = params['downsample']
    x = _ref_convbn(x, ds, 3, 2, x.shape[-1], use_act=False)
    for blk in params['blocks']:
        identity = x
        outs = [x]
        for lp in blk['layers']:
            x = _ref_convbn(x, lp, 3, 1, 1, True)
            outs.append(x)
        x = jnp.concatenate(outs, axis=-1)
        x = _ref_convbn(x, blk['agg'], 1, 1, 1, True)
        x = _ref_ese(x, blk['ese'])
        if blk['identity']:
            x = x + identity
    return jnp.transpose(x, (0, 3, 1, 2))


# ----------------------------------------------------------------------------
if __name__ == "__main__":
    kg = KeyGen(jax.random.PRNGKey(0))
    in_c, mid_c, out_c, block_num, layer_num = 8, 8, 16, 2, 2
    N, H, W = 2, 16, 16

    params = build_params(in_c, mid_c, out_c, block_num, layer_num, kg)
    x = jax.random.normal(kg(), (N, in_c, H, W), jnp.float32)   # NCHW like PyTorch

    y_ref = hg_stage_ref(params, x)

    # f32 MXU operands + f32 storage: strict check against the JAX reference.
    y32 = jax.block_until_ready(hg_stage_pallas(params, x,
                                                compute_dtype=jnp.float32))
    assert y32.shape == y_ref.shape == (N, out_c, H // 2, W // 2), y32.shape
    err32 = float(jnp.max(jnp.abs(y32 - y_ref)))
    if err32 > 5e-3:
        raise AssertionError(f"f32 Pallas/reference mismatch: max abs err = {err32}")

    # bf16 MXU operands + bf16 inter-kernel activations (production config):
    # norm-based sanity check against the f32 reference.
    ybf = jax.block_until_ready(hg_stage_pallas(params, x,
                                                compute_dtype=jnp.bfloat16))
    rel = float(jnp.linalg.norm(ybf - y_ref) / (jnp.linalg.norm(y_ref) + 1e-12))
    if rel > 5e-2:
        raise AssertionError(f"bf16 Pallas/reference rel-l2 err = {rel}")

    print("KERNEL_OK")
</pallas_src>

<mosaic_0001>
module attributes {stable_mosaic.version = 11 : i64} {
  func.func @_dwconv_bn_kernel(%arg0: i32, %arg1: memref<1x4x9x9x8xf32, #tpu.memory_space<vmem>>, %arg2: memref<9x1x8xf32, #tpu.memory_space<vmem>>, %arg3: memref<1x8xf32, #tpu.memory_space<vmem>>, %arg4: memref<1x8x8x8xf32, #tpu.memory_space<vmem>>) attributes {dimension_semantics = [#tpu.dimension_semantics<parallel>], iteration_bounds = array<i64: 2>, scalar_prefetch = 0 : i64, scratch_operands = 0 : i64, tpu.core_type = #tpu.core_type<tc>, window_params = [{transform_indices = @transform_0, window_bounds = array<i64: 1, 4, 9, 9, 8>}, {pipeline_mode = #tpu.pipeline_mode<synchronous>, transform_indices = @transform_1, window_bounds = array<i64: 9, 1, 8>}, {pipeline_mode = #tpu.pipeline_mode<synchronous>, transform_indices = @transform_2, window_bounds = array<i64: 1, 8>}, {transform_indices = @transform_3, window_bounds = array<i64: 1, 8, 8, 8>}]} {
    %cst = arith.constant 0.000000e+00 : f32
    %0 = vector.broadcast %cst : f32 to vector<8x8x8xf32>
    %c0 = arith.constant 0 : index
    %c0_0 = arith.constant 0 : index
    %c0_1 = arith.constant 0 : index
    %c0_2 = arith.constant 0 : index
    %c0_3 = arith.constant 0 : index
    %1 = vector.load %arg1[%c0, %c0_0, %c0_1, %c0_2, %c0_3] : memref<1x4x9x9x8xf32, #tpu.memory_space<vmem>>, vector<1x1x8x8x8xf32>
    %2 = vector.shape_cast %1 : vector<1x1x8x8x8xf32> to vector<8x8x8xf32>
    %c0_4 = arith.constant 0 : index
    %c0_5 = arith.constant 0 : index
    %c0_6 = arith.constant 0 : index
    %3 = vector.load %arg2[%c0_4, %c0_5, %c0_6] : memref<9x1x8xf32, #tpu.memory_space<vmem>>, vector<1x1x8xf32>
    %4 = vector.shape_cast %3 : vector<1x1x8xf32> to vector<1x8xf32>
    %5 = vector.shape_cast %4 : vector<1x8xf32> to vector<1x1x8xf32>
    %6 = vector.broadcast %5 : vector<1x1x8xf32> to vector<8x8x8xf32>
    %7 = arith.mulf %2, %6 : vector<8x8x8xf32>
    %8 = arith.addf %0, %7 : vector<8x8x8xf32>
    %c0_7 = arith.constant 0 : index
    %c1 = arith.constant 1 : index
    %c0_8 = arith.constant 0 : index
    %c0_9 = arith.constant 0 : index
    %c0_10 = arith.constant 0 : index
    %9 = vector.load %arg1[%c0_7, %c1, %c0_8, %c0_9, %c0_10] : memref<1x4x9x9x8xf32, #tpu.memory_space<vmem>>, vector<1x1x8x8x8xf32>
    %10 = vector.shape_cast %9 : vector<1x1x8x8x8xf32> to vector<8x8x8xf32>
    %c1_11 = arith.constant 1 : index
    %c0_12 = arith.constant 0 : index
    %c0_13 = arith.constant 0 : index
    %11 = vector.load %arg2[%c1_11, %c0_12, %c0_13] : memref<9x1x8xf32, #tpu.memory_space<vmem>>, vector<1x1x8xf32>
    %12 = vector.shape_cast %11 : vector<1x1x8xf32> to vector<1x8xf32>
    %13 = vector.shape_cast %12 : vector<1x8xf32> to vector<1x1x8xf32>
    %14 = vector.broadcast %13 : vector<1x1x8xf32> to vector<8x8x8xf32>
    %15 = arith.mulf %10, %14 : vector<8x8x8xf32>
    %16 = arith.addf %8, %15 : vector<8x8x8xf32>
    %c0_14 = arith.constant 0 : index
    %c0_15 = arith.constant 0 : index
    %c0_16 = arith.constant 0 : index
    %c1_17 = arith.constant 1 : index
    %c0_18 = arith.constant 0 : index
    %17 = vector.load %arg1[%c0_14, %c0_15, %c0_16, %c1_17, %c0_18] : memref<1x4x9x9x8xf32, #tpu.memory_space<vmem>>, vector<1x1x8x8x8xf32>
    %18 = vector.shape_cast %17 : vector<1x1x8x8x8xf32> to vector<8x8x8xf32>
    %c2 = arith.constant 2 : index
    %c0_19 = arith.constant 0 : index
    %c0_20 = arith.constant 0 : index
    %19 = vector.load %arg2[%c2, %c0_19, %c0_20] : memref<9x1x8xf32, #tpu.memory_space<vmem>>, vector<1x1x8xf32>
    %20 = vector.shape_cast %19 : vector<1x1x8xf32> to vector<1x8xf32>
    %21 = vector.shape_cast %20 : vector<1x8xf32> to vector<1x1x8xf32>
    %22 = vector.broadcast %21 : vector<1x1x8xf32> to vector<8x8x8xf32>
    %23 = arith.mulf %18, %22 : vector<8x8x8xf32>
    %24 = arith.addf %16, %23 : vector<8x8x8xf32>
    %c0_21 = arith.constant 0 : index
    %c2_22 = arith.constant 2 : index
    %c0_23 = arith.constant 0 : index
    %c0_24 = arith.constant 0 : index
    %c0_25 = arith.constant 0 : index
    %25 = vector.load %arg1[%c0_21, %c2_22, %c0_23, %c0_24, %c0_25] : memref<1x4x9x9x8xf32, #tpu.memory_space<vmem>>, vector<1x1x8x8x8xf32>
    %26 = vector.shape_cast %25 : vector<1x1x8x8x8xf32> to vector<8x8x8xf32>
    %c3 = arith.constant 3 : index
    %c0_26 = arith.constant 0 : index
    %c0_27 = arith.constant 0 : index
    %27 = vector.load %arg2[%c3, %c0_26, %c0_27] : memref<9x1x8xf32, #tpu.memory_space<vmem>>, vector<1x1x8xf32>
    %28 = vector.shape_cast %27 : vector<1x1x8xf32> to vector<1x8xf32>
    %29 = vector.shape_cast %28 : vector<1x8xf32> to vector<1x1x8xf32>
    %30 = vector.broadcast %29 : vector<1x1x8xf32> to vector<8x8x8xf32>
    %31 = arith.mulf %26, %30 : vector<8x8x8xf32>
    %32 = arith.addf %24, %31 : vector<8x8x8xf32>
    %c0_28 = arith.constant 0 : index
    %c3_29 = arith.constant 3 : index
    %c0_30 = arith.constant 0 : index
    %c0_31 = arith.constant 0 : index
    %c0_32 = arith.constant 0 : index
    %33 = vector.load %arg1[%c0_28, %c3_29, %c0_30, %c0_31, %c0_32] : memref<1x4x9x9x8xf32, #tpu.memory_space<vmem>>, vector<1x1x8x8x8xf32>
    %34 = vector.shape_cast %33 : vector<1x1x8x8x8xf32> to vector<8x8x8xf32>
    %c4 = arith.constant 4 : index
    %c0_33 = arith.constant 0 : index
    %c0_34 = arith.constant 0 : index
    %35 = vector.load %arg2[%c4, %c0_33, %c0_34] : memref<9x1x8xf32, #tpu.memory_space<vmem>>, vector<1x1x8xf32>
    %36 = vector.shape_cast %35 : vector<1x1x8xf32> to vector<1x8xf32>
    %37 = vector.shape_cast %36 : vector<1x8xf32> to vector<1x1x8xf32>
    %38 = vector.broadcast %37 : vector<1x1x8xf32> to vector<8x8x8xf32>
    %39 = arith.mulf %34, %38 : vector<8x8x8xf32>
    %40 = arith.addf %32, %39 : vector<8x8x8xf32>
    %c0_35 = arith.constant 0 : index
    %c2_36 = arith.constant 2 : index
    %c0_37 = arith.constant 0 : index
    %c1_38 = arith.constant 1 : index
    %c0_39 = arith.constant 0 : index
    %41 = vector.load %arg1[%c0_35, %c2_36, %c0_37, %c1_38, %c0_39] : memref<1x4x9x9x8xf32, #tpu.memory_space<vmem>>, vector<1x1x8x8x8xf32>
    %42 = vector.shape_cast %41 : vector<1x1x8x8x8xf32> to vector<8x8x8xf32>
    %c5 = arith.constant 5 : index
    %c0_40 = arith.constant 0 : index
    %c0_41 = arith.constant 0 : index
    %43 = vector.load %arg2[%c5, %c0_40, %c0_41] : memref<9x1x8xf32, #tpu.memory_space<vmem>>, vector<1x1x8xf32>
    %44 = vector.shape_cast %43 : vector<1x1x8xf32> to vector<1x8xf32>
    %45 = vector.shape_cast %44 : vector<1x8xf32> to vector<1x1x8xf32>
    %46 = vector.broadcast %45 : vector<1x1x8xf32> to vector<8x8x8xf32>
    %47 = arith.mulf %42, %46 : vector<8x8x8xf32>
    %48 = arith.addf %40, %47 : vector<8x8x8xf32>
    %c0_42 = arith.constant 0 : index
    %c0_43 = arith.constant 0 : index
    %c1_44 = arith.constant 1 : index
    %c0_45 = arith.constant 0 : index
    %c0_46 = arith.constant 0 : index
    %49 = vector.load %arg1[%c0_42, %c0_43, %c1_44, %c0_45, %c0_46] : memref<1x4x9x9x8xf32, #tpu.memory_space<vmem>>, vector<1x1x8x8x8xf32>
    %50 = vector.shape_cast %49 : vector<1x1x8x8x8xf32> to vector<8x8x8xf32>
    %c6 = arith.constant 6 : index
    %c0_47 = arith.constant 0 : index
    %c0_48 = arith.constant 0 : index
    %51 = vector.load %arg2[%c6, %c0_47, %c0_48] : memref<9x1x8xf32, #tpu.memory_space<vmem>>, vector<1x1x8xf32>
    %52 = vector.shape_cast %51 : vector<1x1x8xf32> to vector<1x8xf32>
    %53 = vector.shape_cast %52 : vector<1x8xf32> to vector<1x1x8xf32>
    %54 = vector.broadcast %53 : vector<1x1x8xf32> to vector<8x8x8xf32>
    %55 = arith.mulf %50, %54 : vector<8x8x8xf32>
    %56 = arith.addf %48, %55 : vector<8x8x8xf32>
    %c0_49 = arith.constant 0 : index
    %c1_50 = arith.constant 1 : index
    %c1_51 = arith.constant 1 : index
    %c0_52 = arith.constant 0 : index
    %c0_53 = arith.constant 0 : index
    %57 = vector.load %arg1[%c0_49, %c1_50, %c1_51, %c0_52, %c0_53] : memref<1x4x9x9x8xf32, #tpu.memory_space<vmem>>, vector<1x1x8x8x8xf32>
    %58 = vector.shape_cast %57 : vector<1x1x8x8x8xf32> to vector<8x8x8xf32>
    %c7 = arith.constant 7 : index
    %c0_54 = arith.constant 0 : index
    %c0_55 = arith.constant 0 : index
    %59 = vector.load %arg2[%c7, %c0_54, %c0_55] : memref<9x1x8xf32, #tpu.memory_space<vmem>>, vector<1x1x8xf32>
    %60 = vector.shape_cast %59 : vector<1x1x8xf32> to vector<1x8xf32>
    %61 = vector.shape_cast %60 : vector<1x8xf32> to vector<1x1x8xf32>
    %62 = vector.broadcast %61 : vector<1x1x8xf32> to vector<8x8x8xf32>
    %63 = arith.mulf %58, %62 : vector<8x8x8xf32>
    %64 = arith.addf %56, %63 : vector<8x8x8xf32>
    %c0_56 = arith.constant 0 : index
    %c0_57 = arith.constant 0 : index
    %c1_58 = arith.constant 1 : index
    %c1_59 = arith.constant 1 : index
    %c0_60 = arith.constant 0 : index
    %65 = vector.load %arg1[%c0_56, %c0_57, %c1_58, %c1_59, %c0_60] : memref<1x4x9x9x8xf32, #tpu.memory_space<vmem>>, vector<1x1x8x8x8xf32>
    %66 = vector.shape_cast %65 : vector<1x1x8x8x8xf32> to vector<8x8x8xf32>
    %c8 = arith.constant 8 : index
    %c0_61 = arith.constant 0 : index
    %c0_62 = arith.constant 0 : index
    %67 = vector.load %arg2[%c8, %c0_61, %c0_62] : memref<9x1x8xf32, #tpu.memory_space<vmem>>, vector<1x1x8xf32>
    %68 = vector.shape_cast %67 : vector<1x1x8xf32> to vector<1x8xf32>
    %69 = vector.shape_cast %68 : vector<1x8xf32> to vector<1x1x8xf32>
    %70 = vector.broadcast %69 : vector<1x1x8xf32> to vector<8x8x8xf32>
    %71 = arith.mulf %66, %70 : vector<8x8x8xf32>
    %72 = arith.addf %64, %71 : vector<8x8x8xf32>
    %c0_63 = arith.constant 0 : index
    %c0_64 = arith.constant 0 : index
    %73 = vector.load %arg3[%c0_63, %c0_64] : memref<1x8xf32, #tpu.memory_space<vmem>>, vector<1x8xf32>
    %74 = vector.shape_cast %73 : vector<1x8xf32> to vector<1x1x8xf32>
    %75 = vector.broadcast %74 : vector<1x1x8xf32> to vector<8x8x8xf32>
    %76 = arith.addf %72, %75 : vector<8x8x8xf32>
    %c0_65 = arith.constant 0 : index
    %c0_66 = arith.constant 0 : index
    %c0_67 = arith.constant 0 : index
    %c0_68 = arith.constant 0 : index
    %77 = vector.load %arg4[%c0_65, %c0_66, %c0_67, %c0_68] : memref<1x8x8x8xf32, #tpu.memory_space<vmem>>, vector<1x8x8x8xf32>
    %78 = vector.shape_cast %77 : vector<1x8x8x8xf32> to vector<8x8x8xf32>
    %79 = vector.shape_cast %76 : vector<8x8x8xf32> to vector<1x8x8x8xf32>
    tpu.vector_store %arg4[%c0_65, %c0_66, %c0_67, %c0_68], %79 {strides = array<i32>} : memref<1x8x8x8xf32, #tpu.memory_space<vmem>>, vector<1x8x8x8xf32>,
    return
  }
  func.func @transform_0(%arg0: i32) -> (i32, i32, i32, i32, i32) {
    %c0_i32 = arith.constant 0 : i32
    %c0_i32_0 = arith.constant 0 : i32
    %c0_i32_1 = arith.constant 0 : i32
    %c0_i32_2 = arith.constant 0 : i32
    %c0_i32_3 = arith.constant 0 : i32
    return %arg0, %c0_i32, %c0_i32_0, %c0_i32_1, %c0_i32_2 : i32, i32, i32, i32, i32
  }
  func.func @transform_1(%arg0: i32) -> (i32, i32, i32) {
    %c0_i32 = arith.constant 0 : i32
    %c0_i32_0 = arith.constant 0 : i32
    %c0_i32_1 = arith.constant 0 : i32
    %c0_i32_2 = arith.constant 0 : i32
    return %c0_i32, %c0_i32_0, %c0_i32_1 : i32, i32, i32
  }
  func.func @transform_2(%arg0: i32) -> (i32, i32) {
    %c0_i32 = arith.constant 0 : i32
    %c0_i32_0 = arith.constant 0 : i32
    %c0_i32_1 = arith.constant 0 : i32
    return %c0_i32, %c0_i32_0 : i32, i32
  }
  func.func @transform_3(%arg0: i32) -> (i32, i32, i32, i32) {
    %c0_i32 = arith.constant 0 : i32
    %c0_i32_0 = arith.constant 0 : i32
    %c0_i32_1 = arith.constant 0 : i32
    %c0_i32_2 = arith.constant 0 : i32
    return %arg0, %c0_i32, %c0_i32_0, %c0_i32_1 : i32, i32, i32, i32
  }
}

</mosaic_0001>

<llo_original>
// kernel: tpu_custom_call.1
$region0: #{tpu_custom_call.1}
  #allocation0 [shape = 'u32[]', space=smem, size = 0x4, offset = 0x4, fixed_abs, tag = 'smem constant byte address 0x4 - core index']
  #allocation1 [shape = 'u32[144,128]{1,0:T(1,128)}', space=vmem, size = 0x12000, scoped, tag = 'internal scratch']
  %s0 = inlined_call_operand.vmem [shape: f32[2,4,9,9,8], index: 0, kind: input, shape index: {}]
  %s1 = inlined_call_operand.vmem [shape: f32[9,1,8], index: 1, kind: input, shape index: {}]
  %s2 = inlined_call_operand.vmem [shape: f32[1,8], index: 2, kind: input, shape index: {}]
  %s3 = inlined_call_operand.hbm [shape: f32[2,8,8,8], index: 3, kind: output, shape index: {}]
  %s4 = sld [smem:[#allocation0]]
  $region45: #{tpu_custom_call.1} parent=0
    _
  %s6 = ssub.s32 1, %s4
  %s7 = scalar_select 0, %s6, %s4
  $region1: #{tpu_custom_call.1} parent=0
    #allocation2 [shape = 'u8[65536]{0}', space=vmem, size = 0x10000, scoped, tag = 'output window, operand 0']
    #allocation3 [shape = 's32[2]{0}', space=sflag, size = 0x8, scoped, tag = 'scoped memory for tpu_custom_call.1']
    %8 = vsyncpa [#allocation3], 0
    %s9 = scalar_lea.sflag [#allocation3], 1
    %10 = vsyncpa %s9, 0
    loop: start=0, step=1, limit=4
    $region2: #{tpu_custom_call.1} parent=1 // loop_pre_header
      _
    $region3: #{tpu_custom_call.1} parent=1 // loop_header
      %s12 = sphi 0, %s16
      %p13 = scmp.ge.s32.totalorder %s12, 4
      %s22 = sphi 0, %s24
      %s25 = sphi 0, %s22
      %s26 = sphi 0, %s25
      %s42 = sphi 0, %s26
      %s46 = sphi 0, %s46
      %s48 = sphi 0, %s46
      %s49 = sphi 0, %s48
      %s63 = sphi 0, %s49
      %s67 = sphi 0, %s67
      %s69 = sphi 0, %s67
      %s70 = sphi 0, %s69
      %s84 = sphi 0, %s70
      %s90 = sphi 0, %s92
      %s93 = sphi 0, %s90
      %s94 = sphi 0, %s93
      %s110 = sphi 0, %s94
    $region4: #{tpu_custom_call.1} parent=1 // loop_header_branch
      %15 = sbr.rel (%p13) target = $region8
    $region5: #{tpu_custom_call.1} parent=1 // loop_body
      %s17 = ssub.s32 %s12, 1
      %s18 = ssub.s32 %s12, 2
      %s19 = sadd.s32 %s12, 1
      %s20 = ssub.s32 %s12, %s19
      %p21 = scmp.eq.s32.totalorder %s20, 0
      %s23 = sadd.s32 %s22, 1
      %s24 = scalar_select %p21, %s22, %s23
      %p27 = pneg %p21
      %p28 = scmp.eq.s32.totalorder %s12, 1
      %p29 = por %p27, %p28
      %p30 = scmp.ne.s32.totalorder %s22, %s25
      %p31 = scmp.eq.s32.totalorder %s12, 0
      %p32 = por %p30, %p31
      %p33 = scmp.ne.s32.totalorder %s22, %s25
      %p34 = scmp.eq.s32.totalorder %s17, 1
      %p35 = por %p33, %p34
      %p36 = scmp.ne.s32.totalorder %s25, %s26
      %p37 = scmp.eq.s32.totalorder %s17, 0
      %p38 = por %p36, %p37
      %p39 = scmp.ne.s32.totalorder %s25, %s26
      %p40 = scmp.eq.s32.totalorder %s18, 1
      %p41 = por %p39, %p40
      %p43 = scmp.ne.s32.totalorder %s26, %s42
      %p44 = scmp.eq.s32.totalorder %s18, 0
      %p45 = por %p43, %p44
      %s47 = sadd.s32 %s46, 1
      %p50 = scmp.eq.s32.totalorder %s12, 1
      %p51 = scmp.ne.s32.totalorder %s46, %s48
      %p52 = scmp.eq.s32.totalorder %s12, 0
      %p53 = por %p51, %p52
      %p54 = scmp.ne.s32.totalorder %s46, %s48
      %p55 = scmp.eq.s32.totalorder %s17, 1
      %p56 = por %p54, %p55
      %p57 = scmp.ne.s32.totalorder %s48, %s49
      %p58 = scmp.eq.s32.totalorder %s17, 0
      %p59 = por %p57, %p58
      %p60 = scmp.ne.s32.totalorder %s48, %s49
      %p61 = scmp.eq.s32.totalorder %s18, 1
      %p62 = por %p60, %p61
      %p64 = scmp.ne.s32.totalorder %s49, %s63
      %p65 = scmp.eq.s32.totalorder %s18, 0
      %p66 = por %p64, %p65
      %s68 = sadd.s32 %s67, 1
      %p71 = scmp.eq.s32.totalorder %s12, 1
      %p72 = scmp.ne.s32.totalorder %s67, %s69
      %p73 = scmp.eq.s32.totalorder %s12, 0
      %p74 = por %p72, %p73
      %p75 = scmp.ne.s32.totalorder %s67, %s69
      %p76 = scmp.eq.s32.totalorder %s17, 1
      %p77 = por %p75, %p76
      %p78 = scmp.ne.s32.totalorder %s69, %s70
      %p79 = scmp.eq.s32.totalorder %s17, 0
      %p80 = por %p78, %p79
      %p81 = scmp.ne.s32.totalorder %s69, %s70
      %p82 = scmp.eq.s32.totalorder %s18, 1
      %p83 = por %p81, %p82
      %p85 = scmp.ne.s32.totalorder %s70, %s84
      %p86 = scmp.eq.s32.totalorder %s18, 0
      %p87 = por %p85, %p86
      %s88 = ssub.s32 %s12, %s19
      %p89 = scmp.eq.s32.totalorder %s88, 0
      %s91 = sadd.s32 %s90, 1
      %s92 = scalar_select %p89, %s90, %s91
      %p95 = pneg %p89
      %p96 = scmp.eq.s32.totalorder %s12, 1
      %p97 = por %p95, %p96
      %p98 = scmp.ne.s32.totalorder %s90, %s93
      %p99 = scmp.eq.s32.totalorder %s12, 0
      %p100 = por %p98, %p99
      %p101 = scmp.ne.s32.totalorder %s90, %s93
      %p102 = scmp.eq.s32.totalorder %s17, 1
      %p103 = por %p101, %p102
      %p104 = scmp.ne.s32.totalorder %s93, %s94
      %p105 = scmp.eq.s32.totalorder %s17, 0
      %p106 = por %p104, %p105
      %p107 = scmp.ne.s32.totalorder %s93, %s94
      %p108 = scmp.eq.s32.totalorder %s18, 1
      %p109 = por %p107, %p108
      %p111 = scmp.ne.s32.totalorder %s94, %s110
      %p112 = scmp.eq.s32.totalorder %s18, 0
      %p113 = por %p111, %p112
      %p114 = scmp.le.s32.totalorder 1, %s12
      %p115 = scmp.lt.s32.totalorder %s12, 3
      %p116 = pnand %p114, %p115
      %p117 = pneg %p116
      // Predicated region
      $region9: #{tpu_custom_call.1} parent=5 // pred_check
        _
      $region10: #{tpu_custom_call.1} parent=5 // pred_check_branch
        %119 = sbr.rel (%p116) target = $region12
      $region11: #{tpu_custom_call.1} parent=5 // pred_region
        %s120 = ssub.s32 %s12, 1
        // Predicated region
        $region13: #{tpu_custom_call.1} parent=11 // pred_check
          %p121 = pneg %p59
        $region14: #{tpu_custom_call.1} parent=11 // pred_check_branch
          %123 = sbr.rel (%p121) target = $region16
        $region15: #{tpu_custom_call.1} parent=11 // pred_region
          _
        $region16: #{tpu_custom_call.1} parent=11 // pred_fallthru
          _
        // Predicated region
        $region17: #{tpu_custom_call.1} parent=11 // pred_check
          %p124 = pneg %p80
        $region18: #{tpu_custom_call.1} parent=11 // pred_check_branch
          %126 = sbr.rel (%p124) target = $region20
        $region19: #{tpu_custom_call.1} parent=11 // pred_region
          _
        $region20: #{tpu_custom_call.1} parent=11 // pred_fallthru
          _
      $region12: #{tpu_custom_call.1} parent=5 // pred_fallthru
        _
      %p127 = scmp.lt.s32.totalorder %s12, 2
      // Predicated region
      $region21: #{tpu_custom_call.1} parent=5 // pred_check
        %p128 = pneg %p127
      $region22: #{tpu_custom_call.1} parent=5 // pred_check_branch
        %130 = sbr.rel (%p128) target = $region24
      $region23: #{tpu_custom_call.1} parent=5 // pred_region
        // Predicated region
        $region25: #{tpu_custom_call.1} parent=23 // pred_check
          %p131 = pneg %p32
        $region26: #{tpu_custom_call.1} parent=23 // pred_check_branch
          %133 = sbr.rel (%p131) target = $region28
        $region27: #{tpu_custom_call.1} parent=23 // pred_region
          %p134 = scmp.lt.s32.totalorder %s12, 1
          %s135 = scalar_select %p134, %s12, 1
          %s136 = smul.addr %s135, 72
          %s137 = smul.addr %s136, 8
          %s138 = scalar_lea.vmem %s0, %s137
        $region28: #{tpu_custom_call.1} parent=23 // pred_fallthru
          _
      $region24: #{tpu_custom_call.1} parent=5 // pred_fallthru
        _
      %p139 = scmp.le.s32.totalorder 1, %s12
      %p140 = scmp.lt.s32.totalorder %s12, 3
      %p141 = pnand %p139, %p140
      %p142 = pneg %p141
      // Predicated region
      $region29: #{tpu_custom_call.1} parent=5 // pred_check
        _
      $region30: #{tpu_custom_call.1} parent=5 // pred_check_branch
        %144 = sbr.rel (%p141) target = $region32
      $region31: #{tpu_custom_call.1} parent=5 // pred_region
        %s145 = ssub.s32 %s12, 1
        %p146 = scmp.lt.s32.totalorder %s17, 1
        %s147 = scalar_select %p146, %s17, 1
        %s148 = smul.addr %s147, 72
        %s149 = smul.addr %s148, 8
        %s150 = scalar_lea.vmem %s0, %s149
        %p151 = pneg %p38
        %p152 = pneg %p35
        %p153 = pneg %p59
        %p154 = pneg %p56
        %p155 = pneg %p80
        %p156 = pneg %p77
        %p157 = pneg %p106
        %p158 = pneg %p103
        %s159 = sand.u32 %s93, 1
        %s160 = scalar_lea.sflag [#allocation3], %s159
        %s161 = sand.u32 %s93, 1
        %s162 = smul.addr %s161, 64
        %s163 = scalar_lea.vmem [#allocation2], %s162
        %p164 = scmp.lt.s32.totalorder %s17, 1
        %s165 = scalar_select %p164, %s17, 1
        %s166 = smul.addr %s165, 72
        %s167 = smul.addr %s166, 8
        %s168 = scalar_lea.vmem %s0, %s167
        %v169 = vld [vmem:[%s168] sm:$0xff]
        %v170 = vld [vmem:[%s168 + $0x10] sm:$0xff]
        %v171 = vld [vmem:[%s168 + $0x20] sm:$0xff]
        %v172 = vld [vmem:[%s168 + $0x30] sm:$0xff]
        %v173 = vld [vmem:[%s168 + $0x40] sm:$0xff]
        %v174 = vld [vmem:[%s168 + $0x50] sm:$0xff]
        %v175 = vld [vmem:[%s168 + $0x60] sm:$0xff]
        %v176 = vld [vmem:[%s168 + $0x70] sm:$0xff]
        %v177 = vld [vmem:[%s1] sm:$0x1]
        %v179 = vlaneseq
        %v180 = vshrl.u32 %v179, 7
        %v181 = vsub.s32 0, %v180
        %v182 = vrot.slane %v177, %v181
        %v184 = vmul.f32 %v169, %v182
        %v185 = vmul.f32 %v170, %v182
        %v186 = vmul.f32 %v171, %v182
        %v187 = vmul.f32 %v172, %v182
        %v188 = vmul.f32 %v173, %v182
        %v189 = vmul.f32 %v174, %v182
        %v190 = vmul.f32 %v175, %v182
        %v191 = vmul.f32 %v176, %v182
        %v192 = vadd.f32 %v184, 0.0
        %v193 = vadd.f32 %v185, 0.0
        %v194 = vadd.f32 %v186, 0.0
        %v195 = vadd.f32 %v187, 0.0
        %v196 = vadd.f32 %v188, 0.0
        %v197 = vadd.f32 %v189, 0.0
        %v198 = vadd.f32 %v190, 0.0
        %v199 = vadd.f32 %v191, 0.0
        %s200 = scalar_lea.vmem %s168, 144
        %v201 = vld [vmem:[%s200] sm:$0xff]
        %v202 = vld [vmem:[%s200 + $0x10] sm:$0xff]
        %v203 = vld [vmem:[%s200 + $0x20] sm:$0xff]
        %v204 = vld [vmem:[%s200 + $0x30] sm:$0xff]
        %v205 = vld [vmem:[%s200 + $0x40] sm:$0xff]
        %v206 = vld [vmem:[%s200 + $0x50] sm:$0xff]
        %v207 = vld [vmem:[%s200 + $0x60] sm:$0xff]
        %v208 = vld [vmem:[%s200 + $0x70] sm:$0xff]
        %s209 = scalar_lea.vmem %s1, 1
        %v210 = vld [vmem:[%s209] sm:$0x1]
        %v212 = vlaneseq
        %v213 = vshrl.u32 %v212, 7
        %v214 = vsub.s32 0, %v213
        %v215 = vrot.slane %v210, %v214
        %v217 = vmul.f32 %v201, %v215
        %v218 = vmul.f32 %v202, %v215
        %v219 = vmul.f32 %v203, %v215
        %v220 = vmul.f32 %v204, %v215
        %v221 = vmul.f32 %v205, %v215
        %v222 = vmul.f32 %v206, %v215
        %v223 = vmul.f32 %v207, %v215
        %v224 = vmul.f32 %v208, %v215
        %v225 = vadd.f32 %v192, %v217
        %v226 = vadd.f32 %v193, %v218
        %v227 = vadd.f32 %v194, %v219
        %v228 = vadd.f32 %v195, %v220
        %v229 = vadd.f32 %v196, %v221
        %v230 = vadd.f32 %v197, %v222
        %v231 = vadd.f32 %v198, %v223
        %v232 = vadd.f32 %v199, %v224
        %v233 = vld [vmem:[%s168 + $0x1] sm:$0xff]
        %v234 = vld [vmem:[%s168 + $0x11] sm:$0xff]
        %v235 = vld [vmem:[%s168 + $0x21] sm:$0xff]
        %v236 = vld [vmem:[%s168 + $0x31] sm:$0xff]
        %v237 = vld [vmem:[%s168 + $0x41] sm:$0xff]
        %v238 = vld [vmem:[%s168 + $0x51] sm:$0xff]
        %v239 = vld [vmem:[%s168 + $0x61] sm:$0xff]
        %v240 = vld [vmem:[%s168 + $0x71] sm:$0xff]
        %s241 = scalar_lea.vmem %s1, 2
        %v242 = vld [vmem:[%s241] sm:$0x1]
        %v244 = vlaneseq
        %v245 = vshrl.u32 %v244, 7
        %v246 = vsub.s32 0, %v245
        %v247 = vrot.slane %v242, %v246
        %v249 = vmul.f32 %v233, %v247
        %v250 = vmul.f32 %v234, %v247
        %v251 = vmul.f32 %v235, %v247
        %v252 = vmul.f32 %v236, %v247
        %v253 = vmul.f32 %v237, %v247
        %v254 = vmul.f32 %v238, %v247
        %v255 = vmul.f32 %v239, %v247
        %v256 = vmul.f32 %v240, %v247
        %v257 = vadd.f32 %v225, %v249
        %v258 = vadd.f32 %v226, %v250
        %v259 = vadd.f32 %v227, %v251
        %v260 = vadd.f32 %v228, %v252
        %v261 = vadd.f32 %v229, %v253
        %v262 = vadd.f32 %v230, %v254
        %v263 = vadd.f32 %v231, %v255
        %v264 = vadd.f32 %v232, %v256
        %s265 = scalar_lea.vmem %s168, 288
        %v266 = vld [vmem:[%s265] sm:$0xff]
        %v267 = vld [vmem:[%s265 + $0x10] sm:$0xff]
        %v268 = vld [vmem:[%s265 + $0x20] sm:$0xff]
        %v269 = vld [vmem:[%s265 + $0x30] sm:$0xff]
        %v270 = vld [vmem:[%s265 + $0x40] sm:$0xff]
        %v271 = vld [vmem:[%s265 + $0x50] sm:$0xff]
        %v272 = vld [vmem:[%s265 + $0x60] sm:$0xff]
        %v273 = vld [vmem:[%s265 + $0x70] sm:$0xff]
        %s274 = scalar_lea.vmem %s1, 3
        %v275 = vld [vmem:[%s274] sm:$0x1]
        %v277 = vlaneseq
        %v278 = vshrl.u32 %v277, 7
        %v279 = vsub.s32 0, %v278
        %v280 = vrot.slane %v275, %v279
        %v282 = vmul.f32 %v266, %v280
        %v283 = vmul.f32 %v267, %v280
        %v284 = vmul.f32 %v268, %v280
        %v285 = vmul.f32 %v269, %v280
        %v286 = vmul.f32 %v270, %v280
        %v287 = vmul.f32 %v271, %v280
        %v288 = vmul.f32 %v272, %v280
        %v289 = vmul.f32 %v273, %v280
        %v290 = vadd.f32 %v257, %v282
        %v291 = vadd.f32 %v258, %v283
        %v292 = vadd.f32 %v259, %v284
        %v293 = vadd.f32 %v260, %v285
        %v294 = vadd.f32 %v261, %v286
        %v295 = vadd.f32 %v262, %v287
        %v296 = vadd.f32 %v263, %v288
        %v297 = vadd.f32 %v264, %v289
        %s298 = scalar_lea.vmem %s168, 432
        %v299 = vld [vmem:[%s298] sm:$0xff]
        %v300 = vld [vmem:[%s298 + $0x10] sm:$0xff]
        %v301 = vld [vmem:[%s298 + $0x20] sm:$0xff]
        %v302 = vld [vmem:[%s298 + $0x30] sm:$0xff]
        %v303 = vld [vmem:[%s298 + $0x40] sm:$0xff]
        %v304 = vld [vmem:[%s298 + $0x50] sm:$0xff]
        %v305 = vld [vmem:[%s298 + $0x60] sm:$0xff]
        %v306 = vld [vmem:[%s298 + $0x70] sm:$0xff]
        %s307 = scalar_lea.vmem %s1, 4
        %v308 = vld [vmem:[%s307] sm:$0x1]
        %v310 = vlaneseq
        %v311 = vshrl.u32 %v310, 7
        %v312 = vsub.s32 0, %v311
        %v313 = vrot.slane %v308, %v312
        %v315 = vmul.f32 %v299, %v313
        %v316 = vmul.f32 %v300, %v313
        %v317 = vmul.f32 %v301, %v313
        %v318 = vmul.f32 %v302, %v313
        %v319 = vmul.f32 %v303, %v313
        %v320 = vmul.f32 %v304, %v313
        %v321 = vmul.f32 %v305, %v313
        %v322 = vmul.f32 %v306, %v313
        %v323 = vadd.f32 %v290, %v315
        %v324 = vadd.f32 %v291, %v316
        %v325 = vadd.f32 %v292, %v317
        %v326 = vadd.f32 %v293, %v318
        %v327 = vadd.f32 %v294, %v319
        %v328 = vadd.f32 %v295, %v320
        %v329 = vadd.f32 %v296, %v321
        %v330 = vadd.f32 %v297, %v322
        %v331 = vld [vmem:[%s265 + $0x1] sm:$0xff]
        %v332 = vld [vmem:[%s265 + $0x11] sm:$0xff]
        %v333 = vld [vmem:[%s265 + $0x21] sm:$0xff]
        %v334 = vld [vmem:[%s265 + $0x31] sm:$0xff]
        %v335 = vld [vmem:[%s265 + $0x41] sm:$0xff]
        %v336 = vld [vmem:[%s265 + $0x51] sm:$0xff]
        %v337 = vld [vmem:[%s265 + $0x61] sm:$0xff]
        %v338 = vld [vmem:[%s265 + $0x71] sm:$0xff]
        %s339 = scalar_lea.vmem %s1, 5
        %v340 = vld [vmem:[%s339] sm:$0x1]
        %v342 = vlaneseq
        %v343 = vshrl.u32 %v342, 7
        %v344 = vsub.s32 0, %v343
        %v345 = vrot.slane %v340, %v344
        %v347 = vmul.f32 %v331, %v345
        %v348 = vmul.f32 %v332, %v345
        %v349 = vmul.f32 %v333, %v345
        %v350 = vmul.f32 %v334, %v345
        %v351 = vmul.f32 %v335, %v345
        %v352 = vmul.f32 %v336, %v345
        %v353 = vmul.f32 %v337, %v345
        %v354 = vmul.f32 %v338, %v345
        %v355 = vadd.f32 %v323, %v347
        %v356 = vadd.f32 %v324, %v348
        %v357 = vadd.f32 %v325, %v349
        %v358 = vadd.f32 %v326, %v350
        %v359 = vadd.f32 %v327, %v351
        %v360 = vadd.f32 %v328, %v352
        %v361 = vadd.f32 %v329, %v353
        %v362 = vadd.f32 %v330, %v354
        %s363 = scalar_lea.vmem %s168, 16
        %v364 = vld [vmem:[%s363] sm:$0xff]
        %v365 = vld [vmem:[%s363 + $0x10] sm:$0xff]
        %v366 = vld [vmem:[%s363 + $0x20] sm:$0xff]
        %v367 = vld [vmem:[%s363 + $0x30] sm:$0xff]
        %v368 = vld [vmem:[%s363 + $0x40] sm:$0xff]
        %v369 = vld [vmem:[%s363 + $0x50] sm:$0xff]
        %v370 = vld [vmem:[%s363 + $0x60] sm:$0xff]
        %v371 = vld [vmem:[%s363 + $0x70] sm:$0xff]
        %s372 = scalar_lea.vmem %s1, 6
        %v373 = vld [vmem:[%s372] sm:$0x1]
        %v375 = vlaneseq
        %v376 = vshrl.u32 %v375, 7
        %v377 = vsub.s32 0, %v376
        %v378 = vrot.slane %v373, %v377
        %v380 = vmul.f32 %v364, %v378
        %v381 = vmul.f32 %v365, %v378
        %v382 = vmul.f32 %v366, %v378
        %v383 = vmul.f32 %v367, %v378
        %v384 = vmul.f32 %v368, %v378
        %v385 = vmul.f32 %v369, %v378
        %v386 = vmul.f32 %v370, %v378
        %v387 = vmul.f32 %v371, %v378
        %v388 = vadd.f32 %v355, %v380
        %v389 = vadd.f32 %v356, %v381
        %v390 = vadd.f32 %v357, %v382
        %v391 = vadd.f32 %v358, %v383
        %v392 = vadd.f32 %v359, %v384
        %v393 = vadd.f32 %v360, %v385
        %v394 = vadd.f32 %v361, %v386
        %v395 = vadd.f32 %v362, %v387
        %s396 = scalar_lea.vmem %s168, 160
        %v397 = vld [vmem:[%s396] sm:$0xff]
        %v398 = vld [vmem:[%s396 + $0x10] sm:$0xff]
        %v399 = vld [vmem:[%s396 + $0x20] sm:$0xff]
        %v400 = vld [vmem:[%s396 + $0x30] sm:$0xff]
        %v401 = vld [vmem:[%s396 + $0x40] sm:$0xff]
        %v402 = vld [vmem:[%s396 + $0x50] sm:$0xff]
        %v403 = vld [vmem:[%s396 + $0x60] sm:$0xff]
        %v404 = vld [vmem:[%s396 + $0x70] sm:$0xff]
        %s405 = scalar_lea.vmem %s1, 7
        %v406 = vld [vmem:[%s405] sm:$0x1]
        %v408 = vlaneseq
        %v409 = vshrl.u32 %v408, 7
        %v410 = vsub.s32 0, %v409
        %v411 = vrot.slane %v406, %v410
        %v413 = vmul.f32 %v397, %v411
        %v414 = vmul.f32 %v398, %v411
        %v415 = vmul.f32 %v399, %v411
        %v416 = vmul.f32 %v400, %v411
        %v417 = vmul.f32 %v401, %v411
        %v418 = vmul.f32 %v402, %v411
        %v419 = vmul.f32 %v403, %v411
        %v420 = vmul.f32 %v404, %v411
        %v421 = vadd.f32 %v388, %v413
        %v422 = vadd.f32 %v389, %v414
        %v423 = vadd.f32 %v390, %v415
        %v424 = vadd.f32 %v391, %v416
        %v425 = vadd.f32 %v392, %v417
        %v426 = vadd.f32 %v393, %v418
        %v427 = vadd.f32 %v394, %v419
        %v428 = vadd.f32 %v395, %v420
        %v429 = vld [vmem:[%s363 + $0x1] sm:$0xff]
        %v430 = vld [vmem:[%s363 + $0x11] sm:$0xff]
        %v431 = vld [vmem:[%s363 + $0x21] sm:$0xff]
        %v432 = vld [vmem:[%s363 + $0x31] sm:$0xff]
        %v433 = vld [vmem:[%s363 + $0x41] sm:$0xff]
        %v434 = vld [vmem:[%s363 + $0x51] sm:$0xff]
        %v435 = vld [vmem:[%s363 + $0x61] sm:$0xff]
        %v436 = vld [vmem:[%s363 + $0x71] sm:$0xff]
        %s437 = scalar_lea.vmem %s1, 8
        %v438 = vld [vmem:[%s437] sm:$0x1]
        %v440 = vlaneseq
        %v441 = vshrl.u32 %v440, 7
        %v442 = vsub.s32 0, %v441
        %v443 = vrot.slane %v438, %v442
        %v445 = vmul.f32 %v429, %v443
        %v446 = vmul.f32 %v430, %v443
        %v447 = vmul.f32 %v431, %v443
        %v448 = vmul.f32 %v432, %v443
        %v449 = vmul.f32 %v433, %v443
        %v450 = vmul.f32 %v434, %v443
        %v451 = vmul.f32 %v435, %v443
        %v452 = vmul.f32 %v436, %v443
        %v453 = vadd.f32 %v421, %v445
        %v454 = vadd.f32 %v422, %v446
        %v455 = vadd.f32 %v423, %v447
        %v456 = vadd.f32 %v424, %v448
        %v457 = vadd.f32 %v425, %v449
        %v458 = vadd.f32 %v426, %v450
        %v459 = vadd.f32 %v427, %v451
        %v460 = vadd.f32 %v428, %v452
        %v461 = vld [vmem:[%s2] sm:$0x1]
        %v463 = vlaneseq
        %v464 = vshrl.u32 %v463, 7
        %v465 = vsub.s32 0, %v464
        %v466 = vrot.slane %v461, %v465
        %v468 = vadd.f32 %v453, %v466
        %v469 = vadd.f32 %v454, %v466
        %v470 = vadd.f32 %v455, %v466
        %v471 = vadd.f32 %v456, %v466
        %v472 = vadd.f32 %v457, %v466
        %v473 = vadd.f32 %v458, %v466
        %v474 = vadd.f32 %v459, %v466
        %v475 = vadd.f32 %v460, %v466
        %vm476 = vcmask 64512
        %477 = vst.msk [vmem:[%s163] sm:$0xff] %vm476, %v468
        %478 = vst.msk [vmem:[%s163 + $0x8] sm:$0xff] %vm476, %v469
        %479 = vst.msk [vmem:[%s163 + $0x10] sm:$0xff] %vm476, %v470
        %480 = vst.msk [vmem:[%s163 + $0x18] sm:$0xff] %vm476, %v471
        %481 = vst.msk [vmem:[%s163 + $0x20] sm:$0xff] %vm476, %v472
        %482 = vst.msk [vmem:[%s163 + $0x28] sm:$0xff] %vm476, %v473
        %483 = vst.msk [vmem:[%s163 + $0x30] sm:$0xff] %vm476, %v474
        %484 = vst.msk [vmem:[%s163 + $0x38] sm:$0xff] %vm476, %v475
        %s485 = sand.u32 %s93, 1
        %s486 = scalar_lea.sflag [#allocation3], %s485
        %s487 = sand.u32 %s93, 1
        %s488 = smul.addr %s487, 64
        %s489 = scalar_lea.vmem [#allocation2], %s488
        // Predicated region
        $region33: #{tpu_custom_call.1} parent=31 // pred_check
          %p490 = pneg %p103
        $region34: #{tpu_custom_call.1} parent=31 // pred_check_branch
          %492 = sbr.rel (%p490) target = $region36
        $region35: #{tpu_custom_call.1} parent=31 // pred_region
          %s494 = ssub.s32 1024, 1024
          %495 = vsyncadd %s486, %s494
          %s496 = smul.addr %s17, 8
          %s497 = smul.addr %s496, 128
          %s498 = scalar_lea.hbm %s3, %s497
          %s499 = sshll.u32 %s489, 4
          %s500 = int_to_ptr.vmem [resolvable:$true] %s499
          %505 = dma.vmem_to_hbm [thread:$0]  %s500, 1024, %s498, %s486, 128, 128, 8
        $region36: #{tpu_custom_call.1} parent=31 // pred_fallthru
          _
      $region32: #{tpu_custom_call.1} parent=5 // pred_fallthru
        _
      %p506 = scmp.le.s32.totalorder 2, %s12
      // Predicated region
      $region37: #{tpu_custom_call.1} parent=5 // pred_check
        %p507 = pneg %p506
      $region38: #{tpu_custom_call.1} parent=5 // pred_check_branch
        %509 = sbr.rel (%p507) target = $region40
      $region39: #{tpu_custom_call.1} parent=5 // pred_region
        %s510 = ssub.s32 %s12, 2
        // Predicated region
        $region41: #{tpu_custom_call.1} parent=39 // pred_check
          %p511 = pneg %p109
        $region42: #{tpu_custom_call.1} parent=39 // pred_check_branch
          %513 = sbr.rel (%p511) target = $region44
        $region43: #{tpu_custom_call.1} parent=39 // pred_region
          %s514 = sand.u32 %s94, 1
          %s515 = scalar_lea.sflag [#allocation3], %s514
          %s516 = sand.u32 %s94, 1
          %s517 = smul.addr %s516, 64
          %s518 = scalar_lea.vmem [#allocation2], %s517
          %519 = dma.done %s515, 1024
        $region44: #{tpu_custom_call.1} parent=39 // pred_fallthru
          _
      $region40: #{tpu_custom_call.1} parent=5 // pred_fallthru
        _
    $region6: #{tpu_custom_call.1} parent=1 // loop_footer
      %s16 = sadd.s32 1, %s12
    $region7: #{tpu_custom_call.1} parent=1 // loop_footer_branch
      %11 = sbr.rel target = $region3
    $region8: #{tpu_custom_call.1} parent=1 // loop_exit
      _
    %520 = vsyncpa [#allocation3], 1
    %s521 = scalar_lea.sflag [#allocation3], 1
    %522 = vsyncpa %s521, 1

</llo_original>
